<compile_context>
chip_gen: v7x
topology: tpu7x:2x2x1
jax: 0.10.0
libtpu: 0.0.40
codegen_flags: <defaults>
</compile_context>

<pallas_src>
import jax
import jax.numpy as jnp
from jax.experimental import pallas as pl
from jax.experimental.pallas import tpu as pltpu


def _pos_emb_kernel(pe_ref, in_deg_ref, out_deg_ref, out_ref):
    # pe_ref:      (TN, D)  input dtype
    # in_deg_ref:  (TN, 1)  int32
    # out_deg_ref: (TN, 1)  int32
    # out_ref:     (TN, D)  input dtype
    x = pe_ref[...].astype(jnp.float32)  # accumulate the norm in f32 even for bf16 inputs
    # L2 norm over the last dim. Row-sum goes to the XLU; rsqrt goes to the EUP slot
    # (nearly free under an HBM-bound kernel); the per-row scale folds into one multiply.
    # TODO(synk): on v7x at small D, if the bundle shows the XLU slot binding, replace the
    # lane reduce with an MXU reduce: jnp.dot(x*x, ones((D,1),f32), preferred_element_type=f32).
    sq = jnp.sum(x * x, axis=-1, keepdims=True)
    inv_norm = jax.lax.rsqrt(sq)  # all-zero rows give inf -> NaN, same 0/0 family as torch ref
    deg = (in_deg_ref[...] + out_deg_ref[...]).astype(jnp.float32)  # free VPU filler
    out_ref[...] = (x * (inv_norm * deg)).astype(out_ref.dtype)


def _vmem_budget_bytes():
    """Return (tile_vmem_budget, vmem_limit_bytes) sized per TPU generation."""
    try:
        cap = pltpu.get_tpu_info().vmem_capacity_bytes
    except Exception:
        cap = 64 << 20  # be conservative (v7x-sized) if the query is unavailable
    if cap >= (96 << 20):
        # v5e / v6e: 128 MiB physical VMEM -> large steps, raise the scoped limit.
        return 56 << 20, 72 << 20
    # v7x: 64 MiB physical VMEM -> ~4-6 MiB pe tiles, leave headroom under the limit.
    return 36 << 20, 48 << 20


def _pick_row_tile(N, D, itemsize, vmem_budget_bytes, *, target_pe_bytes=8 << 20):
    """Pick a row tile targeting `target_pe_bytes` of position_encodes per grid step,
    capped by the double-buffered VMEM footprint."""
    # Per-row double-buffered VMEM bytes:
    #   pe-in tile + pe-out tile (D * itemsize each) + two (tn,1) int32 degree columns,
    #   each of which lane-pads to 128 lanes * 4 B = 512 B per row.
    bytes_per_row = 2 * (2 * D * itemsize + 2 * 128 * 4)
    vmem_cap_rows = max(8, vmem_budget_bytes // bytes_per_row)
    target_rows = max(8, target_pe_bytes // max(1, D * itemsize))
    tn = int(min(vmem_cap_rows, target_rows))
    if tn >= N:
        # Whole array fits one step. Keep at least 2 grid steps (when N is big enough)
        # so the input fetch of step i overlaps the writeback of step i-1.
        if N >= 64:
            half = -(-N // 2)          # ceil(N/2)
            return max(8, -(-half // 8) * 8)  # round up to sublane granularity (< N here)
        return N  # tiny array: a full-extent block is always a legal block shape
    return max(8, (tn // 8) * 8)  # sublane granularity; pl.cdiv handles the ragged tail


def position_embedding(position_encodes, in_degree, out_degree, *, row_tile=None):
    """position_encodes: [N, D]; in_degree/out_degree: [N] ints. Returns [N, D]."""
    N, D = position_encodes.shape
    itemsize = position_encodes.dtype.itemsize

    # Only layout plumbing in the wrapper (reshape to a lane-able (N,1) column);
    # the add + float cast happens inside the kernel.
    in_deg = in_degree.astype(jnp.int32).reshape(N, 1)
    out_deg = out_degree.astype(jnp.int32).reshape(N, 1)

    budget, vmem_limit = _vmem_budget_bytes()

    if row_tile is None:
        tn = _pick_row_tile(N, D, itemsize, budget)
    else:
        tn = min(int(row_tile), N)
        if tn < N:
            tn = max(8, (tn // 8) * 8)

    grid = (pl.cdiv(N, tn),)

    return pl.pallas_call(
        _pos_emb_kernel,
        out_shape=jax.ShapeDtypeStruct((N, D), position_encodes.dtype),
        grid_spec=pltpu.PrefetchScalarGridSpec(
            num_scalar_prefetch=0,
            grid=grid,
            in_specs=[
                pl.BlockSpec((tn, D), lambda i: (i, 0)),
                pl.BlockSpec((tn, 1), lambda i: (i, 0)),
                pl.BlockSpec((tn, 1), lambda i: (i, 0)),
            ],
            out_specs=pl.BlockSpec((tn, D), lambda i: (i, 0)),
        ),
        compiler_params=pltpu.CompilerParams(
            # Single parallel axis: grid steps shard across both TCs on v7x
            # (no-op on single-TC v5e/v6e).
            dimension_semantics=("parallel",),
            vmem_limit_bytes=vmem_limit,
        ),
        cost_estimate=pl.CostEstimate(
            flops=3 * N * D,
            transcendentals=N,
            bytes_accessed=2 * N * D * itemsize + 2 * N * 4,
        ),
    )(position_encodes, in_deg, out_deg)


def _reference(position_encodes, in_degree, out_degree):
    norm = jnp.linalg.norm(position_encodes, axis=-1, keepdims=True)
    deg = (in_degree.astype(jnp.int32) + out_degree.astype(jnp.int32)).astype(
        jnp.float32
    )[..., None]
    return position_encodes / norm * deg


if __name__ == "__main__":
    key = jax.random.PRNGKey(0)
    k1, k2, k3 = jax.random.split(key, 3)

    # Small but lane-dense shapes: D=128 (one full lane width), N not a multiple of 8
    # to exercise the padded ragged-tail path.
    N = 1000                   # number of nodes
    D = 128                    # position_embedding_dim
    position_encodes = jax.random.normal(k1, (N, D), dtype=jnp.float32)
    in_degree = jax.random.randint(k2, (N,), 0, 5, dtype=jnp.int32)
    out_degree = jax.random.randint(k3, (N,), 0, 5, dtype=jnp.int32)

    ref = _reference(position_encodes, in_degree, out_degree)

    # 1) auto-tiled path (splits into >=2 pipelined grid steps for this N)
    out = position_embedding(position_encodes, in_degree, out_degree)
    out = jax.block_until_ready(out)
    assert out.shape == (N, D)
    assert jnp.allclose(out, ref, atol=1e-5, rtol=1e-5)

    # 2) forced small tile with ragged tail (tn=256, grid=4)
    out_tiled = position_embedding(position_encodes, in_degree, out_degree, row_tile=256)
    out_tiled = jax.block_until_ready(out_tiled)
    assert jnp.allclose(out_tiled, ref, atol=1e-5, rtol=1e-5)

    print("KERNEL_OK")
</pallas_src>

<mosaic_0001>
module attributes {stable_mosaic.version = 11 : i64} {
  func.func @_pos_emb_kernel(%arg0: i32, %arg1: memref<504x128xf32, #tpu.memory_space<vmem>>, %arg2: memref<504x1xi32, #tpu.memory_space<vmem>>, %arg3: memref<504x1xi32, #tpu.memory_space<vmem>>, %arg4: memref<504x128xf32, #tpu.memory_space<vmem>>) attributes {dimension_semantics = [#tpu.dimension_semantics<parallel>], iteration_bounds = array<i64: 2>, scalar_prefetch = 0 : i64, scratch_operands = 0 : i64, tpu.core_type = #tpu.core_type<tc>, window_params = [{transform_indices = @transform_0, window_bounds = array<i64: 504, 128>}, {transform_indices = @transform_1, window_bounds = array<i64: 504, 1>}, {transform_indices = @transform_2, window_bounds = array<i64: 504, 1>}, {transform_indices = @transform_3, window_bounds = array<i64: 504, 128>}]} {
    %c0 = arith.constant 0 : index
    %c0_0 = arith.constant 0 : index
    %0 = vector.load %arg1[%c0, %c0_0] : memref<504x128xf32, #tpu.memory_space<vmem>>, vector<504x128xf32>
    %1 = arith.mulf %0, %0 : vector<504x128xf32>
    %cst = arith.constant dense<0.000000e+00> : vector<504xf32>
    %2 = vector.multi_reduction <add>, %1, %cst [1] : vector<504x128xf32> to vector<504xf32>
    %3 = vector.shape_cast %2 : vector<504xf32> to vector<504x1xf32>
    %4 = math.rsqrt %3 : vector<504x1xf32>
    %c0_1 = arith.constant 0 : index
    %c0_2 = arith.constant 0 : index
    %5 = vector.load %arg2[%c0_1, %c0_2] : memref<504x1xi32, #tpu.memory_space<vmem>>, vector<504x1xi32>
    %c0_3 = arith.constant 0 : index
    %c0_4 = arith.constant 0 : index
    %6 = vector.load %arg3[%c0_3, %c0_4] : memref<504x1xi32, #tpu.memory_space<vmem>>, vector<504x1xi32>
    %7 = arith.addi %5, %6 : vector<504x1xi32>
    %8 = arith.sitofp %7 : vector<504x1xi32> to vector<504x1xf32>
    %9 = arith.mulf %4, %8 : vector<504x1xf32>
    %10 = vector.broadcast %9 : vector<504x1xf32> to vector<504x128xf32>
    %11 = arith.mulf %0, %10 : vector<504x128xf32>
    %c0_5 = arith.constant 0 : index
    %c0_6 = arith.constant 0 : index
    %12 = vector.load %arg4[%c0_5, %c0_6] : memref<504x128xf32, #tpu.memory_space<vmem>>, vector<504x128xf32>
    tpu.vector_store %arg4[%c0_5, %c0_6], %11 {strides = array<i32>} : memref<504x128xf32, #tpu.memory_space<vmem>>, vector<504x128xf32>,
    return
  }
  func.func @transform_0(%arg0: i32) -> (i32, i32) {
    %c0_i32 = arith.constant 0 : i32
    %c0_i32_0 = arith.constant 0 : i32
    return %arg0, %c0_i32 : i32, i32
  }
  func.func @transform_1(%arg0: i32) -> (i32, i32) {
    %c0_i32 = arith.constant 0 : i32
    %c0_i32_0 = arith.constant 0 : i32
    return %arg0, %c0_i32 : i32, i32
  }
  func.func @transform_2(%arg0: i32) -> (i32, i32) {
    %c0_i32 = arith.constant 0 : i32
    %c0_i32_0 = arith.constant 0 : i32
    return %arg0, %c0_i32 : i32, i32
  }
  func.func @transform_3(%arg0: i32) -> (i32, i32) {
    %c0_i32 = arith.constant 0 : i32
    %c0_i32_0 = arith.constant 0 : i32
    return %arg0, %c0_i32 : i32, i32
  }
}

</mosaic_0001>

<llo_original>
// kernel: tpu_custom_call.1
$region0: #{tpu_custom_call.1}
  #allocation0 [shape = 'u32[]', space=smem, size = 0x4, offset = 0x4, fixed_abs, tag = 'smem constant byte address 0x4 - core index']
  #allocation1 [shape = 'u32[144,128]{1,0:T(1,128)}', space=vmem, size = 0x12000, scoped, tag = 'internal scratch']
  %s0 = inlined_call_operand.vmem [shape: f32[1000,128], index: 0, kind: input, shape index: {}]
  %s1 = inlined_call_operand.vmem [shape: s32[1000,1], index: 1, kind: input, shape index: {}]
  %s2 = inlined_call_operand.vmem [shape: s32[1000,1], index: 2, kind: input, shape index: {}]
  %s3 = inlined_call_operand.hbm [shape: f32[1000,128], index: 3, kind: output, shape index: {}]
  %s4 = sld [smem:[#allocation0]]
  $region45: #{tpu_custom_call.1} parent=0
    _
  %s6 = ssub.s32 1, %s4
  %s7 = scalar_select 0, %s6, %s4
  $region1: #{tpu_custom_call.1} parent=0
    #allocation2 [shape = 'u8[516096]{0}', space=vmem, size = 0x7e000, scoped, tag = 'output window, operand 0']
    #allocation3 [shape = 's32[2]{0}', space=sflag, size = 0x8, scoped, tag = 'scoped memory for tpu_custom_call.1']
    %8 = vsyncpa [#allocation3], 0
    %s9 = scalar_lea.sflag [#allocation3], 1
    %10 = vsyncpa %s9, 0
    loop: start=0, step=1, limit=4
    $region2: #{tpu_custom_call.1} parent=1 // loop_pre_header
      _
    $region3: #{tpu_custom_call.1} parent=1 // loop_header
      %s12 = sphi 0, %s16
      %p13 = scmp.ge.s32.totalorder %s12, 4
      %s22 = sphi 0, %s24
      %s25 = sphi 0, %s22
      %s26 = sphi 0, %s25
      %s42 = sphi 0, %s26
      %s48 = sphi 0, %s50
      %s51 = sphi 0, %s48
      %s52 = sphi 0, %s51
      %s68 = sphi 0, %s52
      %s74 = sphi 0, %s76
      %s77 = sphi 0, %s74
      %s78 = sphi 0, %s77
      %s94 = sphi 0, %s78
      %s100 = sphi 0, %s102
      %s103 = sphi 0, %s100
      %s104 = sphi 0, %s103
      %s120 = sphi 0, %s104
    $region4: #{tpu_custom_call.1} parent=1 // loop_header_branch
      %15 = sbr.rel (%p13) target = $region8
    $region5: #{tpu_custom_call.1} parent=1 // loop_body
      %s17 = ssub.s32 %s12, 1
      %s18 = ssub.s32 %s12, 2
      %s19 = sadd.s32 %s12, 1
      %s20 = ssub.s32 %s12, %s19
      %p21 = scmp.eq.s32.totalorder %s20, 0
      %s23 = sadd.s32 %s22, 1
      %s24 = scalar_select %p21, %s22, %s23
      %p27 = pneg %p21
      %p28 = scmp.eq.s32.totalorder %s12, 1
      %p29 = por %p27, %p28
      %p30 = scmp.ne.s32.totalorder %s22, %s25
      %p31 = scmp.eq.s32.totalorder %s12, 0
      %p32 = por %p30, %p31
      %p33 = scmp.ne.s32.totalorder %s22, %s25
      %p34 = scmp.eq.s32.totalorder %s17, 1
      %p35 = por %p33, %p34
      %p36 = scmp.ne.s32.totalorder %s25, %s26
      %p37 = scmp.eq.s32.totalorder %s17, 0
      %p38 = por %p36, %p37
      %p39 = scmp.ne.s32.totalorder %s25, %s26
      %p40 = scmp.eq.s32.totalorder %s18, 1
      %p41 = por %p39, %p40
      %p43 = scmp.ne.s32.totalorder %s26, %s42
      %p44 = scmp.eq.s32.totalorder %s18, 0
      %p45 = por %p43, %p44
      %s46 = ssub.s32 %s12, %s19
      %p47 = scmp.eq.s32.totalorder %s46, 0
      %s49 = sadd.s32 %s48, 1
      %s50 = scalar_select %p47, %s48, %s49
      %p53 = pneg %p47
      %p54 = scmp.eq.s32.totalorder %s12, 1
      %p55 = por %p53, %p54
      %p56 = scmp.ne.s32.totalorder %s48, %s51
      %p57 = scmp.eq.s32.totalorder %s12, 0
      %p58 = por %p56, %p57
      %p59 = scmp.ne.s32.totalorder %s48, %s51
      %p60 = scmp.eq.s32.totalorder %s17, 1
      %p61 = por %p59, %p60
      %p62 = scmp.ne.s32.totalorder %s51, %s52
      %p63 = scmp.eq.s32.totalorder %s17, 0
      %p64 = por %p62, %p63
      %p65 = scmp.ne.s32.totalorder %s51, %s52
      %p66 = scmp.eq.s32.totalorder %s18, 1
      %p67 = por %p65, %p66
      %p69 = scmp.ne.s32.totalorder %s52, %s68
      %p70 = scmp.eq.s32.totalorder %s18, 0
      %p71 = por %p69, %p70
      %s72 = ssub.s32 %s12, %s19
      %p73 = scmp.eq.s32.totalorder %s72, 0
      %s75 = sadd.s32 %s74, 1
      %s76 = scalar_select %p73, %s74, %s75
      %p79 = pneg %p73
      %p80 = scmp.eq.s32.totalorder %s12, 1
      %p81 = por %p79, %p80
      %p82 = scmp.ne.s32.totalorder %s74, %s77
      %p83 = scmp.eq.s32.totalorder %s12, 0
      %p84 = por %p82, %p83
      %p85 = scmp.ne.s32.totalorder %s74, %s77
      %p86 = scmp.eq.s32.totalorder %s17, 1
      %p87 = por %p85, %p86
      %p88 = scmp.ne.s32.totalorder %s77, %s78
      %p89 = scmp.eq.s32.totalorder %s17, 0
      %p90 = por %p88, %p89
      %p91 = scmp.ne.s32.totalorder %s77, %s78
      %p92 = scmp.eq.s32.totalorder %s18, 1
      %p93 = por %p91, %p92
      %p95 = scmp.ne.s32.totalorder %s78, %s94
      %p96 = scmp.eq.s32.totalorder %s18, 0
      %p97 = por %p95, %p96
      %s98 = ssub.s32 %s12, %s19
      %p99 = scmp.eq.s32.totalorder %s98, 0
      %s101 = sadd.s32 %s100, 1
      %s102 = scalar_select %p99, %s100, %s101
      %p105 = pneg %p99
      %p106 = scmp.eq.s32.totalorder %s12, 1
      %p107 = por %p105, %p106
      %p108 = scmp.ne.s32.totalorder %s100, %s103
      %p109 = scmp.eq.s32.totalorder %s12, 0
      %p110 = por %p108, %p109
      %p111 = scmp.ne.s32.totalorder %s100, %s103
      %p112 = scmp.eq.s32.totalorder %s17, 1
      %p113 = por %p111, %p112
      %p114 = scmp.ne.s32.totalorder %s103, %s104
      %p115 = scmp.eq.s32.totalorder %s17, 0
      %p116 = por %p114, %p115
      %p117 = scmp.ne.s32.totalorder %s103, %s104
      %p118 = scmp.eq.s32.totalorder %s18, 1
      %p119 = por %p117, %p118
      %p121 = scmp.ne.s32.totalorder %s104, %s120
      %p122 = scmp.eq.s32.totalorder %s18, 0
      %p123 = por %p121, %p122
      %p124 = scmp.le.s32.totalorder 1, %s12
      %p125 = scmp.lt.s32.totalorder %s12, 3
      %p126 = pnand %p124, %p125
      %p127 = pneg %p126
      // Predicated region
      $region9: #{tpu_custom_call.1} parent=5 // pred_check
        _
      $region10: #{tpu_custom_call.1} parent=5 // pred_check_branch
        %129 = sbr.rel (%p126) target = $region12
      $region11: #{tpu_custom_call.1} parent=5 // pred_region
        %s130 = ssub.s32 %s12, 1
      $region12: #{tpu_custom_call.1} parent=5 // pred_fallthru
        _
      %p131 = scmp.lt.s32.totalorder %s12, 2
      // Predicated region
      $region13: #{tpu_custom_call.1} parent=5 // pred_check
        %p132 = pneg %p131
      $region14: #{tpu_custom_call.1} parent=5 // pred_check_branch
        %134 = sbr.rel (%p132) target = $region16
      $region15: #{tpu_custom_call.1} parent=5 // pred_region
        // Predicated region
        $region17: #{tpu_custom_call.1} parent=15 // pred_check
          %p135 = pneg %p32
        $region18: #{tpu_custom_call.1} parent=15 // pred_check_branch
          %137 = sbr.rel (%p135) target = $region20
        $region19: #{tpu_custom_call.1} parent=15 // pred_region
          %s138 = smul.u32 63, %s12
          %s139 = ssub.s32 125, %s138
          %p140 = scmp.lt.s32.totalorder %s139, 63
          %s141 = scalar_select %p140, %s139, 63
          %s142 = smul.u32 128, %s141
          %p143 = scmp.lt.s32.totalorder %s138, 124
          %s144 = scalar_select %p143, %s138, 124
          %s145 = smul.addr %s144, 8
          %s146 = scalar_lea.vmem %s0, %s145
          %s147 = smul.u32 63, %s12
          %s148 = ssub.s32 125, %s147
          %p149 = scmp.lt.s32.totalorder %s148, 63
          %s150 = scalar_select %p149, %s148, 63
          %s151 = smul.u32 128, %s150
        $region20: #{tpu_custom_call.1} parent=15 // pred_fallthru
          _
        // Predicated region
        $region21: #{tpu_custom_call.1} parent=15 // pred_check
          %p152 = pneg %p58
        $region22: #{tpu_custom_call.1} parent=15 // pred_check_branch
          %154 = sbr.rel (%p152) target = $region24
        $region23: #{tpu_custom_call.1} parent=15 // pred_region
          %s155 = smul.u32 63, %s12
          %s156 = ssub.s32 125, %s155
          %p157 = scmp.lt.s32.totalorder %s156, 63
          %s158 = scalar_select %p157, %s156, 63
          %s159 = smul.u32 128, %s158
          %p160 = scmp.lt.s32.totalorder %s155, 124
          %s161 = scalar_select %p160, %s155, 124
          %s162 = smul.addr %s161, 8
          %s163 = scalar_lea.vmem %s1, %s162
          %s164 = smul.u32 63, %s12
          %s165 = ssub.s32 125, %s164
          %p166 = scmp.lt.s32.totalorder %s165, 63
          %s167 = scalar_select %p166, %s165, 63
          %s168 = smul.u32 128, %s167
        $region24: #{tpu_custom_call.1} parent=15 // pred_fallthru
          _
        // Predicated region
        $region25: #{tpu_custom_call.1} parent=15 // pred_check
          %p169 = pneg %p84
        $region26: #{tpu_custom_call.1} parent=15 // pred_check_branch
          %171 = sbr.rel (%p169) target = $region28
        $region27: #{tpu_custom_call.1} parent=15 // pred_region
          %s172 = smul.u32 63, %s12
          %s173 = ssub.s32 125, %s172
          %p174 = scmp.lt.s32.totalorder %s173, 63
          %s175 = scalar_select %p174, %s173, 63
          %s176 = smul.u32 128, %s175
          %p177 = scmp.lt.s32.totalorder %s172, 124
          %s178 = scalar_select %p177, %s172, 124
          %s179 = smul.addr %s178, 8
          %s180 = scalar_lea.vmem %s2, %s179
          %s181 = smul.u32 63, %s12
          %s182 = ssub.s32 125, %s181
          %p183 = scmp.lt.s32.totalorder %s182, 63
          %s184 = scalar_select %p183, %s182, 63
          %s185 = smul.u32 128, %s184
        $region28: #{tpu_custom_call.1} parent=15 // pred_fallthru
          _
      $region16: #{tpu_custom_call.1} parent=5 // pred_fallthru
        _
      %p186 = scmp.le.s32.totalorder 1, %s12
      %p187 = scmp.lt.s32.totalorder %s12, 3
      %p188 = pnand %p186, %p187
      %p189 = pneg %p188
      // Predicated region
      $region29: #{tpu_custom_call.1} parent=5 // pred_check
        _
      $region30: #{tpu_custom_call.1} parent=5 // pred_check_branch
        %191 = sbr.rel (%p188) target = $region32
      $region31: #{tpu_custom_call.1} parent=5 // pred_region
        %s192 = ssub.s32 %s12, 1
        %s193 = smul.u32 63, %s17
        %s194 = ssub.s32 125, %s193
        %p195 = scmp.lt.s32.totalorder %s194, 63
        %s196 = scalar_select %p195, %s194, 63
        %s197 = smul.u32 128, %s196
        %p198 = scmp.lt.s32.totalorder %s193, 124
        %s199 = scalar_select %p198, %s193, 124
        %s200 = smul.addr %s199, 8
        %s201 = scalar_lea.vmem %s0, %s200
        %p202 = pneg %p38
        %p203 = pneg %p35
        %s204 = smul.u32 63, %s17
        %s205 = ssub.s32 125, %s204
        %p206 = scmp.lt.s32.totalorder %s205, 63
        %s207 = scalar_select %p206, %s205, 63
        %s208 = smul.u32 128, %s207
        %p209 = scmp.lt.s32.totalorder %s204, 124
        %s210 = scalar_select %p209, %s204, 124
        %s211 = smul.addr %s210, 8
        %s212 = scalar_lea.vmem %s1, %s211
        %p213 = pneg %p64
        %p214 = pneg %p61
        %s215 = smul.u32 63, %s17
        %s216 = ssub.s32 125, %s215
        %p217 = scmp.lt.s32.totalorder %s216, 63
        %s218 = scalar_select %p217, %s216, 63
        %s219 = smul.u32 128, %s218
        %p220 = scmp.lt.s32.totalorder %s215, 124
        %s221 = scalar_select %p220, %s215, 124
        %s222 = smul.addr %s221, 8
        %s223 = scalar_lea.vmem %s2, %s222
        %p224 = pneg %p90
        %p225 = pneg %p87
        %p226 = pneg %p116
        %p227 = pneg %p113
        %s228 = sand.u32 %s103, 1
        %s229 = scalar_lea.sflag [#allocation3], %s228
        %s230 = sand.u32 %s103, 1
        %s231 = smul.addr %s230, 504
        %s232 = scalar_lea.vmem [#allocation2], %s231
        %s233 = smul.u32 63, %s17
        %s234 = ssub.s32 125, %s233
        %p235 = scmp.lt.s32.totalorder %s234, 63
        %s236 = scalar_select %p235, %s234, 63
        %s237 = smul.u32 128, %s236
        %p238 = scmp.lt.s32.totalorder %s233, 124
        %s239 = scalar_select %p238, %s233, 124
        %s240 = smul.addr %s239, 8
        %s241 = scalar_lea.vmem %s0, %s240
        %s242 = smul.u32 63, %s17
        %s243 = ssub.s32 125, %s242
        %p244 = scmp.lt.s32.totalorder %s243, 63
        %s245 = scalar_select %p244, %s243, 63
        %s246 = smul.u32 128, %s245
        %s247 = smul.u32 63, %s17
        %s248 = ssub.s32 125, %s247
        %p249 = scmp.lt.s32.totalorder %s248, 63
        %s250 = scalar_select %p249, %s248, 63
        %s251 = smul.u32 128, %s250
        %p252 = scmp.lt.s32.totalorder %s247, 124
        %s253 = scalar_select %p252, %s247, 124
        %s254 = smul.addr %s253, 8
        %s255 = scalar_lea.vmem %s1, %s254
        %s256 = smul.u32 63, %s17
        %s257 = ssub.s32 125, %s256
        %p258 = scmp.lt.s32.totalorder %s257, 63
        %s259 = scalar_select %p258, %s257, 63
        %s260 = smul.u32 128, %s259
        %s261 = smul.u32 63, %s17
        %s262 = ssub.s32 125, %s261
        %p263 = scmp.lt.s32.totalorder %s262, 63
        %s264 = scalar_select %p263, %s262, 63
        %s265 = smul.u32 128, %s264
        %p266 = scmp.lt.s32.totalorder %s261, 124
        %s267 = scalar_select %p266, %s261, 124
        %s268 = smul.addr %s267, 8
        %s269 = scalar_lea.vmem %s2, %s268
        %s270 = smul.u32 63, %s17
        %s271 = ssub.s32 125, %s270
        %p272 = scmp.lt.s32.totalorder %s271, 63
        %s273 = scalar_select %p272, %s271, 63
        %s274 = smul.u32 128, %s273
        %s275 = smul.u32 63, %s17
        %s276 = ssub.s32 125, %s275
        %p277 = scmp.lt.s32.totalorder %s276, 63
        %s278 = scalar_select %p277, %s276, 63
        %s279 = smul.u32 128, %s278
        %v280 = vld [vmem:[%s241] sm:$0xff]
        %v281 = vld [vmem:[%s241 + $0x8] sm:$0xff]
        %v282 = vld [vmem:[%s241 + $0x10] sm:$0xff]
        %v283 = vld [vmem:[%s241 + $0x18] sm:$0xff]
        %v284 = vld [vmem:[%s241 + $0x20] sm:$0xff]
        %v285 = vld [vmem:[%s241 + $0x28] sm:$0xff]
        %v286 = vld [vmem:[%s241 + $0x30] sm:$0xff]
        %v287 = vld [vmem:[%s241 + $0x38] sm:$0xff]
        %v288 = vld [vmem:[%s241 + $0x40] sm:$0xff]
        %v289 = vld [vmem:[%s241 + $0x48] sm:$0xff]
        %v290 = vld [vmem:[%s241 + $0x50] sm:$0xff]
        %v291 = vld [vmem:[%s241 + $0x58] sm:$0xff]
        %v292 = vld [vmem:[%s241 + $0x60] sm:$0xff]
        %v293 = vld [vmem:[%s241 + $0x68] sm:$0xff]
        %v294 = vld [vmem:[%s241 + $0x70] sm:$0xff]
        %v295 = vld [vmem:[%s241 + $0x78] sm:$0xff]
        %v296 = vld [vmem:[%s241 + $0x80] sm:$0xff]
        %v297 = vld [vmem:[%s241 + $0x88] sm:$0xff]
        %v298 = vld [vmem:[%s241 + $0x90] sm:$0xff]
        %v299 = vld [vmem:[%s241 + $0x98] sm:$0xff]
        %v300 = vld [vmem:[%s241 + $0xa0] sm:$0xff]
        %v301 = vld [vmem:[%s241 + $0xa8] sm:$0xff]
        %v302 = vld [vmem:[%s241 + $0xb0] sm:$0xff]
        %v303 = vld [vmem:[%s241 + $0xb8] sm:$0xff]
        %v304 = vld [vmem:[%s241 + $0xc0] sm:$0xff]
        %v305 = vld [vmem:[%s241 + $0xc8] sm:$0xff]
        %v306 = vld [vmem:[%s241 + $0xd0] sm:$0xff]
        %v307 = vld [vmem:[%s241 + $0xd8] sm:$0xff]
        %v308 = vld [vmem:[%s241 + $0xe0] sm:$0xff]
        %v309 = vld [vmem:[%s241 + $0xe8] sm:$0xff]
        %v310 = vld [vmem:[%s241 + $0xf0] sm:$0xff]
        %v311 = vld [vmem:[%s241 + $0xf8] sm:$0xff]
        %v312 = vld [vmem:[%s241 + $0x100] sm:$0xff]
        %v313 = vld [vmem:[%s241 + $0x108] sm:$0xff]
        %v314 = vld [vmem:[%s241 + $0x110] sm:$0xff]
        %v315 = vld [vmem:[%s241 + $0x118] sm:$0xff]
        %v316 = vld [vmem:[%s241 + $0x120] sm:$0xff]
        %v317 = vld [vmem:[%s241 + $0x128] sm:$0xff]
        %v318 = vld [vmem:[%s241 + $0x130] sm:$0xff]
        %v319 = vld [vmem:[%s241 + $0x138] sm:$0xff]
        %v320 = vld [vmem:[%s241 + $0x140] sm:$0xff]
        %v321 = vld [vmem:[%s241 + $0x148] sm:$0xff]
        %v322 = vld [vmem:[%s241 + $0x150] sm:$0xff]
        %v323 = vld [vmem:[%s241 + $0x158] sm:$0xff]
        %v324 = vld [vmem:[%s241 + $0x160] sm:$0xff]
        %v325 = vld [vmem:[%s241 + $0x168] sm:$0xff]
        %v326 = vld [vmem:[%s241 + $0x170] sm:$0xff]
        %v327 = vld [vmem:[%s241 + $0x178] sm:$0xff]
        %v328 = vld [vmem:[%s241 + $0x180] sm:$0xff]
        %v329 = vld [vmem:[%s241 + $0x188] sm:$0xff]
        %v330 = vld [vmem:[%s241 + $0x190] sm:$0xff]
        %v331 = vld [vmem:[%s241 + $0x198] sm:$0xff]
        %v332 = vld [vmem:[%s241 + $0x1a0] sm:$0xff]
        %v333 = vld [vmem:[%s241 + $0x1a8] sm:$0xff]
        %v334 = vld [vmem:[%s241 + $0x1b0] sm:$0xff]
        %v335 = vld [vmem:[%s241 + $0x1b8] sm:$0xff]
        %v336 = vld [vmem:[%s241 + $0x1c0] sm:$0xff]
        %v337 = vld [vmem:[%s241 + $0x1c8] sm:$0xff]
        %v338 = vld [vmem:[%s241 + $0x1d0] sm:$0xff]
        %v339 = vld [vmem:[%s241 + $0x1d8] sm:$0xff]
        %v340 = vld [vmem:[%s241 + $0x1e0] sm:$0xff]
        %v341 = vld [vmem:[%s241 + $0x1e8] sm:$0xff]
        %v342 = vld [vmem:[%s241 + $0x1f0] sm:$0xff]
        %v343 = vmul.f32 %v280, %v280
        %v344 = vmul.f32 %v281, %v281
        %v345 = vmul.f32 %v282, %v282
        %v346 = vmul.f32 %v283, %v283
        %v347 = vmul.f32 %v284, %v284
        %v348 = vmul.f32 %v285, %v285
        %v349 = vmul.f32 %v286, %v286
        %v350 = vmul.f32 %v287, %v287
        %v351 = vmul.f32 %v288, %v288
        %v352 = vmul.f32 %v289, %v289
        %v353 = vmul.f32 %v290, %v290
        %v354 = vmul.f32 %v291, %v291
        %v355 = vmul.f32 %v292, %v292
        %v356 = vmul.f32 %v293, %v293
        %v357 = vmul.f32 %v294, %v294
        %v358 = vmul.f32 %v295, %v295
        %v359 = vmul.f32 %v296, %v296
        %v360 = vmul.f32 %v297, %v297
        %v361 = vmul.f32 %v298, %v298
        %v362 = vmul.f32 %v299, %v299
        %v363 = vmul.f32 %v300, %v300
        %v364 = vmul.f32 %v301, %v301
        %v365 = vmul.f32 %v302, %v302
        %v366 = vmul.f32 %v303, %v303
        %v367 = vmul.f32 %v304, %v304
        %v368 = vmul.f32 %v305, %v305
        %v369 = vmul.f32 %v306, %v306
        %v370 = vmul.f32 %v307, %v307
        %v371 = vmul.f32 %v308, %v308
        %v372 = vmul.f32 %v309, %v309
        %v373 = vmul.f32 %v310, %v310
        %v374 = vmul.f32 %v311, %v311
        %v375 = vmul.f32 %v312, %v312
        %v376 = vmul.f32 %v313, %v313
        %v377 = vmul.f32 %v314, %v314
        %v378 = vmul.f32 %v315, %v315
        %v379 = vmul.f32 %v316, %v316
        %v380 = vmul.f32 %v317, %v317
        %v381 = vmul.f32 %v318, %v318
        %v382 = vmul.f32 %v319, %v319
        %v383 = vmul.f32 %v320, %v320
        %v384 = vmul.f32 %v321, %v321
        %v385 = vmul.f32 %v322, %v322
        %v386 = vmul.f32 %v323, %v323
        %v387 = vmul.f32 %v324, %v324
        %v388 = vmul.f32 %v325, %v325
        %v389 = vmul.f32 %v326, %v326
        %v390 = vmul.f32 %v327, %v327
        %v391 = vmul.f32 %v328, %v328
        %v392 = vmul.f32 %v329, %v329
        %v393 = vmul.f32 %v330, %v330
        %v394 = vmul.f32 %v331, %v331
        %v395 = vmul.f32 %v332, %v332
        %v396 = vmul.f32 %v333, %v333
        %v397 = vmul.f32 %v334, %v334
        %v398 = vmul.f32 %v335, %v335
        %v399 = vmul.f32 %v336, %v336
        %v400 = vmul.f32 %v337, %v337
        %v401 = vmul.f32 %v338, %v338
        %v402 = vmul.f32 %v339, %v339
        %v403 = vmul.f32 %v340, %v340
        %v404 = vmul.f32 %v341, %v341
        %v405 = vmul.f32 %v342, %v342
        %406 = vadd.xlane.f32.xlu0 %v343
        %v407 = vpop.xlane.xlu0 %406
        %408 = vadd.xlane.f32.xlu0 %v344
        %v409 = vpop.xlane.xlu0 %408
        %410 = vadd.xlane.f32.xlu0 %v345
        %v411 = vpop.xlane.xlu0 %410
        %412 = vadd.xlane.f32.xlu0 %v346
        %v413 = vpop.xlane.xlu0 %412
        %414 = vadd.xlane.f32.xlu0 %v347
        %v415 = vpop.xlane.xlu0 %414
        %416 = vadd.xlane.f32.xlu0 %v348
        %v417 = vpop.xlane.xlu0 %416
        %418 = vadd.xlane.f32.xlu0 %v349
        %v419 = vpop.xlane.xlu0 %418
        %420 = vadd.xlane.f32.xlu0 %v350
        %v421 = vpop.xlane.xlu0 %420
        %422 = vadd.xlane.f32.xlu0 %v351
        %v423 = vpop.xlane.xlu0 %422
        %424 = vadd.xlane.f32.xlu0 %v352
        %v425 = vpop.xlane.xlu0 %424
        %426 = vadd.xlane.f32.xlu0 %v353
        %v427 = vpop.xlane.xlu0 %426
        %428 = vadd.xlane.f32.xlu0 %v354
        %v429 = vpop.xlane.xlu0 %428
        %430 = vadd.xlane.f32.xlu0 %v355
        %v431 = vpop.xlane.xlu0 %430
        %432 = vadd.xlane.f32.xlu0 %v356
        %v433 = vpop.xlane.xlu0 %432
        %434 = vadd.xlane.f32.xlu0 %v357
        %v435 = vpop.xlane.xlu0 %434
        %436 = vadd.xlane.f32.xlu0 %v358
        %v437 = vpop.xlane.xlu0 %436
        %438 = vadd.xlane.f32.xlu0 %v359
        %v439 = vpop.xlane.xlu0 %438
        %440 = vadd.xlane.f32.xlu0 %v360
        %v441 = vpop.xlane.xlu0 %440
        %442 = vadd.xlane.f32.xlu0 %v361
        %v443 = vpop.xlane.xlu0 %442
        %444 = vadd.xlane.f32.xlu0 %v362
        %v445 = vpop.xlane.xlu0 %444
        %446 = vadd.xlane.f32.xlu0 %v363
        %v447 = vpop.xlane.xlu0 %446
        %448 = vadd.xlane.f32.xlu0 %v364
        %v449 = vpop.xlane.xlu0 %448
        %450 = vadd.xlane.f32.xlu0 %v365
        %v451 = vpop.xlane.xlu0 %450
        %452 = vadd.xlane.f32.xlu0 %v366
        %v453 = vpop.xlane.xlu0 %452
        %454 = vadd.xlane.f32.xlu0 %v367
        %v455 = vpop.xlane.xlu0 %454
        %456 = vadd.xlane.f32.xlu0 %v368
        %v457 = vpop.xlane.xlu0 %456
        %458 = vadd.xlane.f32.xlu0 %v369
        %v459 = vpop.xlane.xlu0 %458
        %460 = vadd.xlane.f32.xlu0 %v370
        %v461 = vpop.xlane.xlu0 %460
        %462 = vadd.xlane.f32.xlu0 %v371
        %v463 = vpop.xlane.xlu0 %462
        %464 = vadd.xlane.f32.xlu0 %v372
        %v465 = vpop.xlane.xlu0 %464
        %466 = vadd.xlane.f32.xlu0 %v373
        %v467 = vpop.xlane.xlu0 %466
        %468 = vadd.xlane.f32.xlu0 %v374
        %v469 = vpop.xlane.xlu0 %468
        %470 = vadd.xlane.f32.xlu0 %v375
        %v471 = vpop.xlane.xlu0 %470
        %472 = vadd.xlane.f32.xlu0 %v376
        %v473 = vpop.xlane.xlu0 %472
        %474 = vadd.xlane.f32.xlu0 %v377
        %v475 = vpop.xlane.xlu0 %474
        %476 = vadd.xlane.f32.xlu0 %v378
        %v477 = vpop.xlane.xlu0 %476
        %478 = vadd.xlane.f32.xlu0 %v379
        %v479 = vpop.xlane.xlu0 %478
        %480 = vadd.xlane.f32.xlu0 %v380
        %v481 = vpop.xlane.xlu0 %480
        %482 = vadd.xlane.f32.xlu0 %v381
        %v483 = vpop.xlane.xlu0 %482
        %484 = vadd.xlane.f32.xlu0 %v382
        %v485 = vpop.xlane.xlu0 %484
        %486 = vadd.xlane.f32.xlu0 %v383
        %v487 = vpop.xlane.xlu0 %486
        %488 = vadd.xlane.f32.xlu0 %v384
        %v489 = vpop.xlane.xlu0 %488
        %490 = vadd.xlane.f32.xlu0 %v385
        %v491 = vpop.xlane.xlu0 %490
        %492 = vadd.xlane.f32.xlu0 %v386
        %v493 = vpop.xlane.xlu0 %492
        %494 = vadd.xlane.f32.xlu0 %v387
        %v495 = vpop.xlane.xlu0 %494
        %496 = vadd.xlane.f32.xlu0 %v388
        %v497 = vpop.xlane.xlu0 %496
        %498 = vadd.xlane.f32.xlu0 %v389
        %v499 = vpop.xlane.xlu0 %498
        %500 = vadd.xlane.f32.xlu0 %v390
        %v501 = vpop.xlane.xlu0 %500
        %502 = vadd.xlane.f32.xlu0 %v391
        %v503 = vpop.xlane.xlu0 %502
        %504 = vadd.xlane.f32.xlu0 %v392
        %v505 = vpop.xlane.xlu0 %504
        %506 = vadd.xlane.f32.xlu0 %v393
        %v507 = vpop.xlane.xlu0 %506
        %508 = vadd.xlane.f32.xlu0 %v394
        %v509 = vpop.xlane.xlu0 %508
        %510 = vadd.xlane.f32.xlu0 %v395
        %v511 = vpop.xlane.xlu0 %510
        %512 = vadd.xlane.f32.xlu0 %v396
        %v513 = vpop.xlane.xlu0 %512
        %514 = vadd.xlane.f32.xlu0 %v397
        %v515 = vpop.xlane.xlu0 %514
        %516 = vadd.xlane.f32.xlu0 %v398
        %v517 = vpop.xlane.xlu0 %516
        %518 = vadd.xlane.f32.xlu0 %v399
        %v519 = vpop.xlane.xlu0 %518
        %520 = vadd.xlane.f32.xlu0 %v400
        %v521 = vpop.xlane.xlu0 %520
        %522 = vadd.xlane.f32.xlu0 %v401
        %v523 = vpop.xlane.xlu0 %522
        %524 = vadd.xlane.f32.xlu0 %v402
        %v525 = vpop.xlane.xlu0 %524
        %526 = vadd.xlane.f32.xlu0 %v403
        %v527 = vpop.xlane.xlu0 %526
        %528 = vadd.xlane.f32.xlu0 %v404
        %v529 = vpop.xlane.xlu0 %528
        %530 = vadd.xlane.f32.xlu0 %v405
        %v531 = vpop.xlane.xlu0 %530
        %v532 = vrsqrt.pop %v407
        %v533 = vrsqrt.pop %v409
        %v534 = vrsqrt.pop %v411
        %v535 = vrsqrt.pop %v413
        %v536 = vrsqrt.pop %v415
        %v537 = vrsqrt.pop %v417
        %v538 = vrsqrt.pop %v419
        %v539 = vrsqrt.pop %v421
        %v540 = vrsqrt.pop %v423
        %v541 = vrsqrt.pop %v425
        %v542 = vrsqrt.pop %v427
        %v543 = vrsqrt.pop %v429
        %v544 = vrsqrt.pop %v431
        %v545 = vrsqrt.pop %v433
        %v546 = vrsqrt.pop %v435
        %v547 = vrsqrt.pop %v437
        %v548 = vrsqrt.pop %v439
        %v549 = vrsqrt.pop %v441
        %v550 = vrsqrt.pop %v443
        %v551 = vrsqrt.pop %v445
        %v552 = vrsqrt.pop %v447
        %v553 = vrsqrt.pop %v449
        %v554 = vrsqrt.pop %v451
        %v555 = vrsqrt.pop %v453
        %v556 = vrsqrt.pop %v455
        %v557 = vrsqrt.pop %v457
        %v558 = vrsqrt.pop %v459
        %v559 = vrsqrt.pop %v461
        %v560 = vrsqrt.pop %v463
        %v561 = vrsqrt.pop %v465
        %v562 = vrsqrt.pop %v467
        %v563 = vrsqrt.pop %v469
        %v564 = vrsqrt.pop %v471
        %v565 = vrsqrt.pop %v473
        %v566 = vrsqrt.pop %v475
        %v567 = vrsqrt.pop %v477
        %v568 = vrsqrt.pop %v479
        %v569 = vrsqrt.pop %v481
        %v570 = vrsqrt.pop %v483
        %v571 = vrsqrt.pop %v485
        %v572 = vrsqrt.pop %v487
        %v573 = vrsqrt.pop %v489
        %v574 = vrsqrt.pop %v491
        %v575 = vrsqrt.pop %v493
        %v576 = vrsqrt.pop %v495
        %v577 = vrsqrt.pop %v497
        %v578 = vrsqrt.pop %v499
        %v579 = vrsqrt.pop %v501
        %v580 = vrsqrt.pop %v503
        %v581 = vrsqrt.pop %v505
        %v582 = vrsqrt.pop %v507
        %v583 = vrsqrt.pop %v509
        %v584 = vrsqrt.pop %v511
        %v585 = vrsqrt.pop %v513
        %v586 = vrsqrt.pop %v515
        %v587 = vrsqrt.pop %v517
        %v588 = vrsqrt.pop %v519
        %v589 = vrsqrt.pop %v521
        %v590 = vrsqrt.pop %v523
        %v591 = vrsqrt.pop %v525
        %v592 = vrsqrt.pop %v527
        %v593 = vrsqrt.pop %v529
        %v594 = vrsqrt.pop %v531
        %v595 = vld [vmem:[%s255] sm:$0xff]
        %v596 = vld [vmem:[%s255 + $0x8] sm:$0xff]
        %v597 = vld [vmem:[%s255 + $0x10] sm:$0xff]
        %v598 = vld [vmem:[%s255 + $0x18] sm:$0xff]
        %v599 = vld [vmem:[%s255 + $0x20] sm:$0xff]
        %v600 = vld [vmem:[%s255 + $0x28] sm:$0xff]
        %v601 = vld [vmem:[%s255 + $0x30] sm:$0xff]
        %v602 = vld [vmem:[%s255 + $0x38] sm:$0xff]
        %v603 = vld [vmem:[%s255 + $0x40] sm:$0xff]
        %v604 = vld [vmem:[%s255 + $0x48] sm:$0xff]
        %v605 = vld [vmem:[%s255 + $0x50] sm:$0xff]
        %v606 = vld [vmem:[%s255 + $0x58] sm:$0xff]
        %v607 = vld [vmem:[%s255 + $0x60] sm:$0xff]
        %v608 = vld [vmem:[%s255 + $0x68] sm:$0xff]
        %v609 = vld [vmem:[%s255 + $0x70] sm:$0xff]
        %v610 = vld [vmem:[%s255 + $0x78] sm:$0xff]
        %v611 = vld [vmem:[%s255 + $0x80] sm:$0xff]
        %v612 = vld [vmem:[%s255 + $0x88] sm:$0xff]
        %v613 = vld [vmem:[%s255 + $0x90] sm:$0xff]
        %v614 = vld [vmem:[%s255 + $0x98] sm:$0xff]
        %v615 = vld [vmem:[%s255 + $0xa0] sm:$0xff]
        %v616 = vld [vmem:[%s255 + $0xa8] sm:$0xff]
        %v617 = vld [vmem:[%s255 + $0xb0] sm:$0xff]
        %v618 = vld [vmem:[%s255 + $0xb8] sm:$0xff]
        %v619 = vld [vmem:[%s255 + $0xc0] sm:$0xff]
        %v620 = vld [vmem:[%s255 + $0xc8] sm:$0xff]
        %v621 = vld [vmem:[%s255 + $0xd0] sm:$0xff]
        %v622 = vld [vmem:[%s255 + $0xd8] sm:$0xff]
        %v623 = vld [vmem:[%s255 + $0xe0] sm:$0xff]
        %v624 = vld [vmem:[%s255 + $0xe8] sm:$0xff]
        %v625 = vld [vmem:[%s255 + $0xf0] sm:$0xff]
        %v626 = vld [vmem:[%s255 + $0xf8] sm:$0xff]
        %v627 = vld [vmem:[%s255 + $0x100] sm:$0xff]
        %v628 = vld [vmem:[%s255 + $0x108] sm:$0xff]
        %v629 = vld [vmem:[%s255 + $0x110] sm:$0xff]
        %v630 = vld [vmem:[%s255 + $0x118] sm:$0xff]
        %v631 = vld [vmem:[%s255 + $0x120] sm:$0xff]
        %v632 = vld [vmem:[%s255 + $0x128] sm:$0xff]
        %v633 = vld [vmem:[%s255 + $0x130] sm:$0xff]
        %v634 = vld [vmem:[%s255 + $0x138] sm:$0xff]
        %v635 = vld [vmem:[%s255 + $0x140] sm:$0xff]
        %v636 = vld [vmem:[%s255 + $0x148] sm:$0xff]
        %v637 = vld [vmem:[%s255 + $0x150] sm:$0xff]
        %v638 = vld [vmem:[%s255 + $0x158] sm:$0xff]
        %v639 = vld [vmem:[%s255 + $0x160] sm:$0xff]
        %v640 = vld [vmem:[%s255 + $0x168] sm:$0xff]
        %v641 = vld [vmem:[%s255 + $0x170] sm:$0xff]
        %v642 = vld [vmem:[%s255 + $0x178] sm:$0xff]
        %v643 = vld [vmem:[%s255 + $0x180] sm:$0xff]
        %v644 = vld [vmem:[%s255 + $0x188] sm:$0xff]
        %v645 = vld [vmem:[%s255 + $0x190] sm:$0xff]
        %v646 = vld [vmem:[%s255 + $0x198] sm:$0xff]
        %v647 = vld [vmem:[%s255 + $0x1a0] sm:$0xff]
        %v648 = vld [vmem:[%s255 + $0x1a8] sm:$0xff]
        %v649 = vld [vmem:[%s255 + $0x1b0] sm:$0xff]
        %v650 = vld [vmem:[%s255 + $0x1b8] sm:$0xff]
        %v651 = vld [vmem:[%s255 + $0x1c0] sm:$0xff]
        %v652 = vld [vmem:[%s255 + $0x1c8] sm:$0xff]
        %v653 = vld [vmem:[%s255 + $0x1d0] sm:$0xff]
        %v654 = vld [vmem:[%s255 + $0x1d8] sm:$0xff]
        %v655 = vld [vmem:[%s255 + $0x1e0] sm:$0xff]
        %v656 = vld [vmem:[%s255 + $0x1e8] sm:$0xff]
        %v657 = vld [vmem:[%s255 + $0x1f0] sm:$0xff]
        %v658 = vld [vmem:[%s269] sm:$0xff]
        %v659 = vld [vmem:[%s269 + $0x8] sm:$0xff]
        %v660 = vld [vmem:[%s269 + $0x10] sm:$0xff]
        %v661 = vld [vmem:[%s269 + $0x18] sm:$0xff]
        %v662 = vld [vmem:[%s269 + $0x20] sm:$0xff]
        %v663 = vld [vmem:[%s269 + $0x28] sm:$0xff]
        %v664 = vld [vmem:[%s269 + $0x30] sm:$0xff]
        %v665 = vld [vmem:[%s269 + $0x38] sm:$0xff]
        %v666 = vld [vmem:[%s269 + $0x40] sm:$0xff]
        %v667 = vld [vmem:[%s269 + $0x48] sm:$0xff]
        %v668 = vld [vmem:[%s269 + $0x50] sm:$0xff]
        %v669 = vld [vmem:[%s269 + $0x58] sm:$0xff]
        %v670 = vld [vmem:[%s269 + $0x60] sm:$0xff]
        %v671 = vld [vmem:[%s269 + $0x68] sm:$0xff]
        %v672 = vld [vmem:[%s269 + $0x70] sm:$0xff]
        %v673 = vld [vmem:[%s269 + $0x78] sm:$0xff]
        %v674 = vld [vmem:[%s269 + $0x80] sm:$0xff]
        %v675 = vld [vmem:[%s269 + $0x88] sm:$0xff]
        %v676 = vld [vmem:[%s269 + $0x90] sm:$0xff]
        %v677 = vld [vmem:[%s269 + $0x98] sm:$0xff]
        %v678 = vld [vmem:[%s269 + $0xa0] sm:$0xff]
        %v679 = vld [vmem:[%s269 + $0xa8] sm:$0xff]
        %v680 = vld [vmem:[%s269 + $0xb0] sm:$0xff]
        %v681 = vld [vmem:[%s269 + $0xb8] sm:$0xff]
        %v682 = vld [vmem:[%s269 + $0xc0] sm:$0xff]
        %v683 = vld [vmem:[%s269 + $0xc8] sm:$0xff]
        %v684 = vld [vmem:[%s269 + $0xd0] sm:$0xff]
        %v685 = vld [vmem:[%s269 + $0xd8] sm:$0xff]
        %v686 = vld [vmem:[%s269 + $0xe0] sm:$0xff]
        %v687 = vld [vmem:[%s269 + $0xe8] sm:$0xff]
        %v688 = vld [vmem:[%s269 + $0xf0] sm:$0xff]
        %v689 = vld [vmem:[%s269 + $0xf8] sm:$0xff]
        %v690 = vld [vmem:[%s269 + $0x100] sm:$0xff]
        %v691 = vld [vmem:[%s269 + $0x108] sm:$0xff]
        %v692 = vld [vmem:[%s269 + $0x110] sm:$0xff]
        %v693 = vld [vmem:[%s269 + $0x118] sm:$0xff]
        %v694 = vld [vmem:[%s269 + $0x120] sm:$0xff]
        %v695 = vld [vmem:[%s269 + $0x128] sm:$0xff]
        %v696 = vld [vmem:[%s269 + $0x130] sm:$0xff]
        %v697 = vld [vmem:[%s269 + $0x138] sm:$0xff]
        %v698 = vld [vmem:[%s269 + $0x140] sm:$0xff]
        %v699 = vld [vmem:[%s269 + $0x148] sm:$0xff]
        %v700 = vld [vmem:[%s269 + $0x150] sm:$0xff]
        %v701 = vld [vmem:[%s269 + $0x158] sm:$0xff]
        %v702 = vld [vmem:[%s269 + $0x160] sm:$0xff]
        %v703 = vld [vmem:[%s269 + $0x168] sm:$0xff]
        %v704 = vld [vmem:[%s269 + $0x170] sm:$0xff]
        %v705 = vld [vmem:[%s269 + $0x178] sm:$0xff]
        %v706 = vld [vmem:[%s269 + $0x180] sm:$0xff]
        %v707 = vld [vmem:[%s269 + $0x188] sm:$0xff]
        %v708 = vld [vmem:[%s269 + $0x190] sm:$0xff]
        %v709 = vld [vmem:[%s269 + $0x198] sm:$0xff]
        %v710 = vld [vmem:[%s269 + $0x1a0] sm:$0xff]
        %v711 = vld [vmem:[%s269 + $0x1a8] sm:$0xff]
        %v712 = vld [vmem:[%s269 + $0x1b0] sm:$0xff]
        %v713 = vld [vmem:[%s269 + $0x1b8] sm:$0xff]
        %v714 = vld [vmem:[%s269 + $0x1c0] sm:$0xff]
        %v715 = vld [vmem:[%s269 + $0x1c8] sm:$0xff]
        %v716 = vld [vmem:[%s269 + $0x1d0] sm:$0xff]
        %v717 = vld [vmem:[%s269 + $0x1d8] sm:$0xff]
        %v718 = vld [vmem:[%s269 + $0x1e0] sm:$0xff]
        %v719 = vld [vmem:[%s269 + $0x1e8] sm:$0xff]
        %v720 = vld [vmem:[%s269 + $0x1f0] sm:$0xff]
        %v721 = vadd.s32 %v595, %v658
        %v722 = vadd.s32 %v596, %v659
        %v723 = vadd.s32 %v597, %v660
        %v724 = vadd.s32 %v598, %v661
        %v725 = vadd.s32 %v599, %v662
        %v726 = vadd.s32 %v600, %v663
        %v727 = vadd.s32 %v601, %v664
        %v728 = vadd.s32 %v602, %v665
        %v729 = vadd.s32 %v603, %v666
        %v730 = vadd.s32 %v604, %v667
        %v731 = vadd.s32 %v605, %v668
        %v732 = vadd.s32 %v606, %v669
        %v733 = vadd.s32 %v607, %v670
        %v734 = vadd.s32 %v608, %v671
        %v735 = vadd.s32 %v609, %v672
        %v736 = vadd.s32 %v610, %v673
        %v737 = vadd.s32 %v611, %v674
        %v738 = vadd.s32 %v612, %v675
        %v739 = vadd.s32 %v613, %v676
        %v740 = vadd.s32 %v614, %v677
        %v741 = vadd.s32 %v615, %v678
        %v742 = vadd.s32 %v616, %v679
        %v743 = vadd.s32 %v617, %v680
        %v744 = vadd.s32 %v618, %v681
        %v745 = vadd.s32 %v619, %v682
        %v746 = vadd.s32 %v620, %v683
        %v747 = vadd.s32 %v621, %v684
        %v748 = vadd.s32 %v622, %v685
        %v749 = vadd.s32 %v623, %v686
        %v750 = vadd.s32 %v624, %v687
        %v751 = vadd.s32 %v625, %v688
        %v752 = vadd.s32 %v626, %v689
        %v753 = vadd.s32 %v627, %v690
        %v754 = vadd.s32 %v628, %v691
        %v755 = vadd.s32 %v629, %v692
        %v756 = vadd.s32 %v630, %v693
        %v757 = vadd.s32 %v631, %v694
        %v758 = vadd.s32 %v632, %v695
        %v759 = vadd.s32 %v633, %v696
        %v760 = vadd.s32 %v634, %v697
        %v761 = vadd.s32 %v635, %v698
        %v762 = vadd.s32 %v636, %v699
        %v763 = vadd.s32 %v637, %v700
        %v764 = vadd.s32 %v638, %v701
        %v765 = vadd.s32 %v639, %v702
        %v766 = vadd.s32 %v640, %v703
        %v767 = vadd.s32 %v641, %v704
        %v768 = vadd.s32 %v642, %v705
        %v769 = vadd.s32 %v643, %v706
        %v770 = vadd.s32 %v644, %v707
        %v771 = vadd.s32 %v645, %v708
        %v772 = vadd.s32 %v646, %v709
        %v773 = vadd.s32 %v647, %v710
        %v774 = vadd.s32 %v648, %v711
        %v775 = vadd.s32 %v649, %v712
        %v776 = vadd.s32 %v650, %v713
        %v777 = vadd.s32 %v651, %v714
        %v778 = vadd.s32 %v652, %v715
        %v779 = vadd.s32 %v653, %v716
        %v780 = vadd.s32 %v654, %v717
        %v781 = vadd.s32 %v655, %v718
        %v782 = vadd.s32 %v656, %v719
        %v783 = vadd.s32 %v657, %v720
        %v784 = vcvt.s32.f32 %v721
        %v785 = vcvt.s32.f32 %v722
        %v786 = vcvt.s32.f32 %v723
        %v787 = vcvt.s32.f32 %v724
        %v788 = vcvt.s32.f32 %v725
        %v789 = vcvt.s32.f32 %v726
        %v790 = vcvt.s32.f32 %v727
        %v791 = vcvt.s32.f32 %v728
        %v792 = vcvt.s32.f32 %v729
        %v793 = vcvt.s32.f32 %v730
        %v794 = vcvt.s32.f32 %v731
        %v795 = vcvt.s32.f32 %v732
        %v796 = vcvt.s32.f32 %v733
        %v797 = vcvt.s32.f32 %v734
        %v798 = vcvt.s32.f32 %v735
        %v799 = vcvt.s32.f32 %v736
        %v800 = vcvt.s32.f32 %v737
        %v801 = vcvt.s32.f32 %v738
        %v802 = vcvt.s32.f32 %v739
        %v803 = vcvt.s32.f32 %v740
        %v804 = vcvt.s32.f32 %v741
        %v805 = vcvt.s32.f32 %v742
        %v806 = vcvt.s32.f32 %v743
        %v807 = vcvt.s32.f32 %v744
        %v808 = vcvt.s32.f32 %v745
        %v809 = vcvt.s32.f32 %v746
        %v810 = vcvt.s32.f32 %v747
        %v811 = vcvt.s32.f32 %v748
        %v812 = vcvt.s32.f32 %v749
        %v813 = vcvt.s32.f32 %v750
        %v814 = vcvt.s32.f32 %v751
        %v815 = vcvt.s32.f32 %v752
        %v816 = vcvt.s32.f32 %v753
        %v817 = vcvt.s32.f32 %v754
        %v818 = vcvt.s32.f32 %v755
        %v819 = vcvt.s32.f32 %v756
        %v820 = vcvt.s32.f32 %v757
        %v821 = vcvt.s32.f32 %v758
        %v822 = vcvt.s32.f32 %v759
        %v823 = vcvt.s32.f32 %v760
        %v824 = vcvt.s32.f32 %v761
        %v825 = vcvt.s32.f32 %v762
        %v826 = vcvt.s32.f32 %v763
        %v827 = vcvt.s32.f32 %v764
        %v828 = vcvt.s32.f32 %v765
        %v829 = vcvt.s32.f32 %v766
        %v830 = vcvt.s32.f32 %v767
        %v831 = vcvt.s32.f32 %v768
        %v832 = vcvt.s32.f32 %v769
        %v833 = vcvt.s32.f32 %v770
        %v834 = vcvt.s32.f32 %v771
        %v835 = vcvt.s32.f32 %v772
        %v836 = vcvt.s32.f32 %v773
        %v837 = vcvt.s32.f32 %v774
        %v838 = vcvt.s32.f32 %v775
        %v839 = vcvt.s32.f32 %v776
        %v840 = vcvt.s32.f32 %v777
        %v841 = vcvt.s32.f32 %v778
        %v842 = vcvt.s32.f32 %v779
        %v843 = vcvt.s32.f32 %v780
        %v844 = vcvt.s32.f32 %v781
        %v845 = vcvt.s32.f32 %v782
        %v846 = vcvt.s32.f32 %v783
        %v847 = vmul.f32 %v532, %v784
        %v848 = vmul.f32 %v533, %v785
        %v849 = vmul.f32 %v534, %v786
        %v850 = vmul.f32 %v535, %v787
        %v851 = vmul.f32 %v536, %v788
        %v852 = vmul.f32 %v537, %v789
        %v853 = vmul.f32 %v538, %v790
        %v854 = vmul.f32 %v539, %v791
        %v855 = vmul.f32 %v540, %v792
        %v856 = vmul.f32 %v541, %v793
        %v857 = vmul.f32 %v542, %v794
        %v858 = vmul.f32 %v543, %v795
        %v859 = vmul.f32 %v544, %v796
        %v860 = vmul.f32 %v545, %v797
        %v861 = vmul.f32 %v546, %v798
        %v862 = vmul.f32 %v547, %v799
        %v863 = vmul.f32 %v548, %v800
        %v864 = vmul.f32 %v549, %v801
        %v865 = vmul.f32 %v550, %v802
        %v866 = vmul.f32 %v551, %v803
        %v867 = vmul.f32 %v552, %v804
        %v868 = vmul.f32 %v553, %v805
        %v869 = vmul.f32 %v554, %v806
        %v870 = vmul.f32 %v555, %v807
        %v871 = vmul.f32 %v556, %v808
        %v872 = vmul.f32 %v557, %v809
        %v873 = vmul.f32 %v558, %v810
        %v874 = vmul.f32 %v559, %v811
        %v875 = vmul.f32 %v560, %v812
        %v876 = vmul.f32 %v561, %v813
        %v877 = vmul.f32 %v562, %v814
        %v878 = vmul.f32 %v563, %v815
        %v879 = vmul.f32 %v564, %v816
        %v880 = vmul.f32 %v565, %v817
        %v881 = vmul.f32 %v566, %v818
        %v882 = vmul.f32 %v567, %v819
        %v883 = vmul.f32 %v568, %v820
        %v884 = vmul.f32 %v569, %v821
        %v885 = vmul.f32 %v570, %v822
        %v886 = vmul.f32 %v571, %v823
        %v887 = vmul.f32 %v572, %v824
        %v888 = vmul.f32 %v573, %v825
        %v889 = vmul.f32 %v574, %v826
        %v890 = vmul.f32 %v575, %v827
        %v891 = vmul.f32 %v576, %v828
        %v892 = vmul.f32 %v577, %v829
        %v893 = vmul.f32 %v578, %v830
        %v894 = vmul.f32 %v579, %v831
        %v895 = vmul.f32 %v580, %v832
        %v896 = vmul.f32 %v581, %v833
        %v897 = vmul.f32 %v582, %v834
        %v898 = vmul.f32 %v583, %v835
        %v899 = vmul.f32 %v584, %v836
        %v900 = vmul.f32 %v585, %v837
        %v901 = vmul.f32 %v586, %v838
        %v902 = vmul.f32 %v587, %v839
        %v903 = vmul.f32 %v588, %v840
        %v904 = vmul.f32 %v589, %v841
        %v905 = vmul.f32 %v590, %v842
        %v906 = vmul.f32 %v591, %v843
        %v907 = vmul.f32 %v592, %v844
        %v908 = vmul.f32 %v593, %v845
        %v909 = vmul.f32 %v594, %v846
        %911 = vset.pattern.permute.xlu0 0
        %912 = vperm.xlu0 %911, %v847
        %v913 = vpop.permute.xlu0 %912
        %916 = vset.pattern.permute.xlu0 0
        %917 = vperm.xlu0 %916, %v848
        %v918 = vpop.permute.xlu0 %917
        %921 = vset.pattern.permute.xlu0 0
        %922 = vperm.xlu0 %921, %v849
        %v923 = vpop.permute.xlu0 %922
        %926 = vset.pattern.permute.xlu0 0
        %927 = vperm.xlu0 %926, %v850
        %v928 = vpop.permute.xlu0 %927
        %931 = vset.pattern.permute.xlu0 0
        %932 = vperm.xlu0 %931, %v851
        %v933 = vpop.permute.xlu0 %932
        %936 = vset.pattern.permute.xlu0 0
        %937 = vperm.xlu0 %936, %v852
        %v938 = vpop.permute.xlu0 %937
        %941 = vset.pattern.permute.xlu0 0
        %942 = vperm.xlu0 %941, %v853
        %v943 = vpop.permute.xlu0 %942
        %946 = vset.pattern.permute.xlu0 0
        %947 = vperm.xlu0 %946, %v854
        %v948 = vpop.permute.xlu0 %947
        %951 = vset.pattern.permute.xlu0 0
        %952 = vperm.xlu0 %951, %v855
        %v953 = vpop.permute.xlu0 %952
        %956 = vset.pattern.permute.xlu0 0
        %957 = vperm.xlu0 %956, %v856
        %v958 = vpop.permute.xlu0 %957
        %961 = vset.pattern.permute.xlu0 0
        %962 = vperm.xlu0 %961, %v857
        %v963 = vpop.permute.xlu0 %962
        %966 = vset.pattern.permute.xlu0 0
        %967 = vperm.xlu0 %966, %v858
        %v968 = vpop.permute.xlu0 %967
        %971 = vset.pattern.permute.xlu0 0
        %972 = vperm.xlu0 %971, %v859
        %v973 = vpop.permute.xlu0 %972
        %976 = vset.pattern.permute.xlu0 0
        %977 = vperm.xlu0 %976, %v860
        %v978 = vpop.permute.xlu0 %977
        %981 = vset.pattern.permute.xlu0 0
        %982 = vperm.xlu0 %981, %v861
        %v983 = vpop.permute.xlu0 %982
        %986 = vset.pattern.permute.xlu0 0
        %987 = vperm.xlu0 %986, %v862
        %v988 = vpop.permute.xlu0 %987
        %991 = vset.pattern.permute.xlu0 0
        %992 = vperm.xlu0 %991, %v863
        %v993 = vpop.permute.xlu0 %992
        %996 = vset.pattern.permute.xlu0 0
        %997 = vperm.xlu0 %996, %v864
        %v998 = vpop.permute.xlu0 %997
        %1001 = vset.pattern.permute.xlu0 0
        %1002 = vperm.xlu0 %1001, %v865
        %v1003 = vpop.permute.xlu0 %1002
        %1006 = vset.pattern.permute.xlu0 0
        %1007 = vperm.xlu0 %1006, %v866
        %v1008 = vpop.permute.xlu0 %1007
        %1011 = vset.pattern.permute.xlu0 0
        %1012 = vperm.xlu0 %1011, %v867
        %v1013 = vpop.permute.xlu0 %1012
        %1016 = vset.pattern.permute.xlu0 0
        %1017 = vperm.xlu0 %1016, %v868
        %v1018 = vpop.permute.xlu0 %1017
        %1021 = vset.pattern.permute.xlu0 0
        %1022 = vperm.xlu0 %1021, %v869
        %v1023 = vpop.permute.xlu0 %1022
        %1026 = vset.pattern.permute.xlu0 0
        %1027 = vperm.xlu0 %1026, %v870
        %v1028 = vpop.permute.xlu0 %1027
        %1031 = vset.pattern.permute.xlu0 0
        %1032 = vperm.xlu0 %1031, %v871
        %v1033 = vpop.permute.xlu0 %1032
        %1036 = vset.pattern.permute.xlu0 0
        %1037 = vperm.xlu0 %1036, %v872
        %v1038 = vpop.permute.xlu0 %1037
        %1041 = vset.pattern.permute.xlu0 0
        %1042 = vperm.xlu0 %1041, %v873
        %v1043 = vpop.permute.xlu0 %1042
        %1046 = vset.pattern.permute.xlu0 0
        %1047 = vperm.xlu0 %1046, %v874
        %v1048 = vpop.permute.xlu0 %1047
        %1051 = vset.pattern.permute.xlu0 0
        %1052 = vperm.xlu0 %1051, %v875
        %v1053 = vpop.permute.xlu0 %1052
        %1056 = vset.pattern.permute.xlu0 0
        %1057 = vperm.xlu0 %1056, %v876
        %v1058 = vpop.permute.xlu0 %1057
        %1061 = vset.pattern.permute.xlu0 0
        %1062 = vperm.xlu0 %1061, %v877
        %v1063 = vpop.permute.xlu0 %1062
        %1066 = vset.pattern.permute.xlu0 0
        %1067 = vperm.xlu0 %1066, %v878
        %v1068 = vpop.permute.xlu0 %1067
        %1071 = vset.pattern.permute.xlu0 0
        %1072 = vperm.xlu0 %1071, %v879
        %v1073 = vpop.permute.xlu0 %1072
        %1076 = vset.pattern.permute.xlu0 0
        %1077 = vperm.xlu0 %1076, %v880
        %v1078 = vpop.permute.xlu0 %1077
        %1081 = vset.pattern.permute.xlu0 0
        %1082 = vperm.xlu0 %1081, %v881
        %v1083 = vpop.permute.xlu0 %1082
        %1086 = vset.pattern.permute.xlu0 0
        %1087 = vperm.xlu0 %1086, %v882
        %v1088 = vpop.permute.xlu0 %1087
        %1091 = vset.pattern.permute.xlu0 0
        %1092 = vperm.xlu0 %1091, %v883
        %v1093 = vpop.permute.xlu0 %1092
        %1096 = vset.pattern.permute.xlu0 0
        %1097 = vperm.xlu0 %1096, %v884
        %v1098 = vpop.permute.xlu0 %1097
        %1101 = vset.pattern.permute.xlu0 0
        %1102 = vperm.xlu0 %1101, %v885
        %v1103 = vpop.permute.xlu0 %1102
        %1106 = vset.pattern.permute.xlu0 0
        %1107 = vperm.xlu0 %1106, %v886
        %v1108 = vpop.permute.xlu0 %1107
        %1111 = vset.pattern.permute.xlu0 0
        %1112 = vperm.xlu0 %1111, %v887
        %v1113 = vpop.permute.xlu0 %1112
        %1116 = vset.pattern.permute.xlu0 0
        %1117 = vperm.xlu0 %1116, %v888
        %v1118 = vpop.permute.xlu0 %1117
        %1121 = vset.pattern.permute.xlu0 0
        %1122 = vperm.xlu0 %1121, %v889
        %v1123 = vpop.permute.xlu0 %1122
        %1126 = vset.pattern.permute.xlu0 0
        %1127 = vperm.xlu0 %1126, %v890
        %v1128 = vpop.permute.xlu0 %1127
        %1131 = vset.pattern.permute.xlu0 0
        %1132 = vperm.xlu0 %1131, %v891
        %v1133 = vpop.permute.xlu0 %1132
        %1136 = vset.pattern.permute.xlu0 0
        %1137 = vperm.xlu0 %1136, %v892
        %v1138 = vpop.permute.xlu0 %1137
        %1141 = vset.pattern.permute.xlu0 0
        %1142 = vperm.xlu0 %1141, %v893
        %v1143 = vpop.permute.xlu0 %1142
        %1146 = vset.pattern.permute.xlu0 0
        %1147 = vperm.xlu0 %1146, %v894
        %v1148 = vpop.permute.xlu0 %1147
        %1151 = vset.pattern.permute.xlu0 0
        %1152 = vperm.xlu0 %1151, %v895
        %v1153 = vpop.permute.xlu0 %1152
        %1156 = vset.pattern.permute.xlu0 0
        %1157 = vperm.xlu0 %1156, %v896
        %v1158 = vpop.permute.xlu0 %1157
        %1161 = vset.pattern.permute.xlu0 0
        %1162 = vperm.xlu0 %1161, %v897
        %v1163 = vpop.permute.xlu0 %1162
        %1166 = vset.pattern.permute.xlu0 0
        %1167 = vperm.xlu0 %1166, %v898
        %v1168 = vpop.permute.xlu0 %1167
        %1171 = vset.pattern.permute.xlu0 0
        %1172 = vperm.xlu0 %1171, %v899
        %v1173 = vpop.permute.xlu0 %1172
        %1176 = vset.pattern.permute.xlu0 0
        %1177 = vperm.xlu0 %1176, %v900
        %v1178 = vpop.permute.xlu0 %1177
        %1181 = vset.pattern.permute.xlu0 0
        %1182 = vperm.xlu0 %1181, %v901
        %v1183 = vpop.permute.xlu0 %1182
        %1186 = vset.pattern.permute.xlu0 0
        %1187 = vperm.xlu0 %1186, %v902
        %v1188 = vpop.permute.xlu0 %1187
        %1191 = vset.pattern.permute.xlu0 0
        %1192 = vperm.xlu0 %1191, %v903
        %v1193 = vpop.permute.xlu0 %1192
        %1196 = vset.pattern.permute.xlu0 0
        %1197 = vperm.xlu0 %1196, %v904
        %v1198 = vpop.permute.xlu0 %1197
        %1201 = vset.pattern.permute.xlu0 0
        %1202 = vperm.xlu0 %1201, %v905
        %v1203 = vpop.permute.xlu0 %1202
        %1206 = vset.pattern.permute.xlu0 0
        %1207 = vperm.xlu0 %1206, %v906
        %v1208 = vpop.permute.xlu0 %1207
        %1211 = vset.pattern.permute.xlu0 0
        %1212 = vperm.xlu0 %1211, %v907
        %v1213 = vpop.permute.xlu0 %1212
        %1216 = vset.pattern.permute.xlu0 0
        %1217 = vperm.xlu0 %1216, %v908
        %v1218 = vpop.permute.xlu0 %1217
        %1221 = vset.pattern.permute.xlu0 0
        %1222 = vperm.xlu0 %1221, %v909
        %v1223 = vpop.permute.xlu0 %1222
        %v1225 = vmul.f32 %v280, %v913
        %v1226 = vmul.f32 %v281, %v918
        %v1227 = vmul.f32 %v282, %v923
        %v1228 = vmul.f32 %v283, %v928
        %v1229 = vmul.f32 %v284, %v933
        %v1230 = vmul.f32 %v285, %v938
        %v1231 = vmul.f32 %v286, %v943
        %v1232 = vmul.f32 %v287, %v948
        %v1233 = vmul.f32 %v288, %v953
        %v1234 = vmul.f32 %v289, %v958
        %v1235 = vmul.f32 %v290, %v963
        %v1236 = vmul.f32 %v291, %v968
        %v1237 = vmul.f32 %v292, %v973
        %v1238 = vmul.f32 %v293, %v978
        %v1239 = vmul.f32 %v294, %v983
        %v1240 = vmul.f32 %v295, %v988
        %v1241 = vmul.f32 %v296, %v993
        %v1242 = vmul.f32 %v297, %v998
        %v1243 = vmul.f32 %v298, %v1003
        %v1244 = vmul.f32 %v299, %v1008
        %v1245 = vmul.f32 %v300, %v1013
        %v1246 = vmul.f32 %v301, %v1018
        %v1247 = vmul.f32 %v302, %v1023
        %v1248 = vmul.f32 %v303, %v1028
        %v1249 = vmul.f32 %v304, %v1033
        %v1250 = vmul.f32 %v305, %v1038
        %v1251 = vmul.f32 %v306, %v1043
        %v1252 = vmul.f32 %v307, %v1048
        %v1253 = vmul.f32 %v308, %v1053
        %v1254 = vmul.f32 %v309, %v1058
        %v1255 = vmul.f32 %v310, %v1063
        %v1256 = vmul.f32 %v311, %v1068
        %v1257 = vmul.f32 %v312, %v1073
        %v1258 = vmul.f32 %v313, %v1078
        %v1259 = vmul.f32 %v314, %v1083
        %v1260 = vmul.f32 %v315, %v1088
        %v1261 = vmul.f32 %v316, %v1093
        %v1262 = vmul.f32 %v317, %v1098
        %v1263 = vmul.f32 %v318, %v1103
        %v1264 = vmul.f32 %v319, %v1108
        %v1265 = vmul.f32 %v320, %v1113
        %v1266 = vmul.f32 %v321, %v1118
        %v1267 = vmul.f32 %v322, %v1123
        %v1268 = vmul.f32 %v323, %v1128
        %v1269 = vmul.f32 %v324, %v1133
        %v1270 = vmul.f32 %v325, %v1138
        %v1271 = vmul.f32 %v326, %v1143
        %v1272 = vmul.f32 %v327, %v1148
        %v1273 = vmul.f32 %v328, %v1153
        %v1274 = vmul.f32 %v329, %v1158
        %v1275 = vmul.f32 %v330, %v1163
        %v1276 = vmul.f32 %v331, %v1168
        %v1277 = vmul.f32 %v332, %v1173
        %v1278 = vmul.f32 %v333, %v1178
        %v1279 = vmul.f32 %v334, %v1183
        %v1280 = vmul.f32 %v335, %v1188
        %v1281 = vmul.f32 %v336, %v1193
        %v1282 = vmul.f32 %v337, %v1198
        %v1283 = vmul.f32 %v338, %v1203
        %v1284 = vmul.f32 %v339, %v1208
        %v1285 = vmul.f32 %v340, %v1213
        %v1286 = vmul.f32 %v341, %v1218
        %v1287 = vmul.f32 %v342, %v1223
        %1288 = vst [vmem:[%s232] sm:$0xff] %v1225
        %1289 = vst [vmem:[%s232 + $0x8] sm:$0xff] %v1226
        %1290 = vst [vmem:[%s232 + $0x10] sm:$0xff] %v1227
        %1291 = vst [vmem:[%s232 + $0x18] sm:$0xff] %v1228
        %1292 = vst [vmem:[%s232 + $0x20] sm:$0xff] %v1229
        %1293 = vst [vmem:[%s232 + $0x28] sm:$0xff] %v1230
        %1294 = vst [vmem:[%s232 + $0x30] sm:$0xff] %v1231
        %1295 = vst [vmem:[%s232 + $0x38] sm:$0xff] %v1232
        %1296 = vst [vmem:[%s232 + $0x40] sm:$0xff] %v1233
        %1297 = vst [vmem:[%s232 + $0x48] sm:$0xff] %v1234
        %1298 = vst [vmem:[%s232 + $0x50] sm:$0xff] %v1235
        %1299 = vst [vmem:[%s232 + $0x58] sm:$0xff] %v1236
        %1300 = vst [vmem:[%s232 + $0x60] sm:$0xff] %v1237
        %1301 = vst [vmem:[%s232 + $0x68] sm:$0xff] %v1238
        %1302 = vst [vmem:[%s232 + $0x70] sm:$0xff] %v1239
        %1303 = vst [vmem:[%s232 + $0x78] sm:$0xff] %v1240
        %1304 = vst [vmem:[%s232 + $0x80] sm:$0xff] %v1241
        %1305 = vst [vmem:[%s232 + $0x88] sm:$0xff] %v1242
        %1306 = vst [vmem:[%s232 + $0x90] sm:$0xff] %v1243
        %1307 = vst [vmem:[%s232 + $0x98] sm:$0xff] %v1244
        %1308 = vst [vmem:[%s232 + $0xa0] sm:$0xff] %v1245
        %1309 = vst [vmem:[%s232 + $0xa8] sm:$0xff] %v1246
        %1310 = vst [vmem:[%s232 + $0xb0] sm:$0xff] %v1247
        %1311 = vst [vmem:[%s232 + $0xb8] sm:$0xff] %v1248
        %1312 = vst [vmem:[%s232 + $0xc0] sm:$0xff] %v1249
        %1313 = vst [vmem:[%s232 + $0xc8] sm:$0xff] %v1250
        %1314 = vst [vmem:[%s232 + $0xd0] sm:$0xff] %v1251
        %1315 = vst [vmem:[%s232 + $0xd8] sm:$0xff] %v1252
        %1316 = vst [vmem:[%s232 + $0xe0] sm:$0xff] %v1253
        %1317 = vst [vmem:[%s232 + $0xe8] sm:$0xff] %v1254
        %1318 = vst [vmem:[%s232 + $0xf0] sm:$0xff] %v1255
        %1319 = vst [vmem:[%s232 + $0xf8] sm:$0xff] %v1256
        %1320 = vst [vmem:[%s232 + $0x100] sm:$0xff] %v1257
        %1321 = vst [vmem:[%s232 + $0x108] sm:$0xff] %v1258
        %1322 = vst [vmem:[%s232 + $0x110] sm:$0xff] %v1259
        %1323 = vst [vmem:[%s232 + $0x118] sm:$0xff] %v1260
        %1324 = vst [vmem:[%s232 + $0x120] sm:$0xff] %v1261
        %1325 = vst [vmem:[%s232 + $0x128] sm:$0xff] %v1262
        %1326 = vst [vmem:[%s232 + $0x130] sm:$0xff] %v1263
        %1327 = vst [vmem:[%s232 + $0x138] sm:$0xff] %v1264
        %1328 = vst [vmem:[%s232 + $0x140] sm:$0xff] %v1265
        %1329 = vst [vmem:[%s232 + $0x148] sm:$0xff] %v1266
        %1330 = vst [vmem:[%s232 + $0x150] sm:$0xff] %v1267
        %1331 = vst [vmem:[%s232 + $0x158] sm:$0xff] %v1268
        %1332 = vst [vmem:[%s232 + $0x160] sm:$0xff] %v1269
        %1333 = vst [vmem:[%s232 + $0x168] sm:$0xff] %v1270
        %1334 = vst [vmem:[%s232 + $0x170] sm:$0xff] %v1271
        %1335 = vst [vmem:[%s232 + $0x178] sm:$0xff] %v1272
        %1336 = vst [vmem:[%s232 + $0x180] sm:$0xff] %v1273
        %1337 = vst [vmem:[%s232 + $0x188] sm:$0xff] %v1274
        %1338 = vst [vmem:[%s232 + $0x190] sm:$0xff] %v1275
        %1339 = vst [vmem:[%s232 + $0x198] sm:$0xff] %v1276
        %1340 = vst [vmem:[%s232 + $0x1a0] sm:$0xff] %v1277
        %1341 = vst [vmem:[%s232 + $0x1a8] sm:$0xff] %v1278
        %1342 = vst [vmem:[%s232 + $0x1b0] sm:$0xff] %v1279
        %1343 = vst [vmem:[%s232 + $0x1b8] sm:$0xff] %v1280
        %1344 = vst [vmem:[%s232 + $0x1c0] sm:$0xff] %v1281
        %1345 = vst [vmem:[%s232 + $0x1c8] sm:$0xff] %v1282
        %1346 = vst [vmem:[%s232 + $0x1d0] sm:$0xff] %v1283
        %1347 = vst [vmem:[%s232 + $0x1d8] sm:$0xff] %v1284
        %1348 = vst [vmem:[%s232 + $0x1e0] sm:$0xff] %v1285
        %1349 = vst [vmem:[%s232 + $0x1e8] sm:$0xff] %v1286
        %1350 = vst [vmem:[%s232 + $0x1f0] sm:$0xff] %v1287
        %s1351 = sand.u32 %s103, 1
        %s1352 = scalar_lea.sflag [#allocation3], %s1351
        %s1353 = sand.u32 %s103, 1
        %s1354 = smul.addr %s1353, 504
        %s1355 = scalar_lea.vmem [#allocation2], %s1354
        // Predicated region
        $region33: #{tpu_custom_call.1} parent=31 // pred_check
          %p1356 = pneg %p113
        $region34: #{tpu_custom_call.1} parent=31 // pred_check_branch
          %1358 = sbr.rel (%p1356) target = $region36
        $region35: #{tpu_custom_call.1} parent=31 // pred_region
          %s1359 = smul.u32 63, %s17
          %s1360 = ssub.s32 125, %s1359
          %p1361 = scmp.lt.s32.totalorder %s1360, 63
          %s1362 = scalar_select %p1361, %s1360, 63
          %s1363 = smul.u32 128, %s1362
          %s1365 = ssub.s32 8064, %s1363
          %1366 = vsyncadd %s1352, %s1365
          %p1367 = scmp.ne.s32.totalorder 0, %s1363
          %s1368 = smul.addr %s1359, 128
          %s1369 = scalar_lea.hbm %s3, %s1368
          %s1370 = smul.u32 8, %s1362
          %s1371 = sshll.u32 %s1355, 4
          %s1372 = int_to_ptr.vmem [resolvable:$true] %s1371
          %s1373 = sshll.u32 %s1370, 4
          %1377 = dma.vmem_to_hbm [thread:$0]  (%p1367), %s1372, %s1373, %s1369, %s1352, 128, 128, 8
        $region36: #{tpu_custom_call.1} parent=31 // pred_fallthru
          _
      $region32: #{tpu_custom_call.1} parent=5 // pred_fallthru
        _
      %p1378 = scmp.le.s32.totalorder 2, %s12
      // Predicated region
      $region37: #{tpu_custom_call.1} parent=5 // pred_check
        %p1379 = pneg %p1378
      $region38: #{tpu_custom_call.1} parent=5 // pred_check_branch
        %1381 = sbr.rel (%p1379) target = $region40
      $region39: #{tpu_custom_call.1} parent=5 // pred_region
        %s1382 = ssub.s32 %s12, 2
        // Predicated region
        $region41: #{tpu_custom_call.1} parent=39 // pred_check
          %p1383 = pneg %p119
        $region42: #{tpu_custom_call.1} parent=39 // pred_check_branch
          %1385 = sbr.rel (%p1383) target = $region44
        $region43: #{tpu_custom_call.1} parent=39 // pred_region
          %s1386 = sand.u32 %s104, 1
          %s1387 = scalar_lea.sflag [#allocation3], %s1386
          %s1388 = sand.u32 %s104, 1
          %s1389 = smul.addr %s1388, 504
          %s1390 = scalar_lea.vmem [#allocation2], %s1389
          %1391 = dma.done %s1387, 8064
        $region44: #{tpu_custom_call.1} parent=39 // pred_fallthru
          _
      $region40: #{tpu_custom_call.1} parent=5 // pred_fallthru
        _
    $region6: #{tpu_custom_call.1} parent=1 // loop_footer
      %s16 = sadd.s32 1, %s12
    $region7: #{tpu_custom_call.1} parent=1 // loop_footer_branch
      %11 = sbr.rel target = $region3
    $region8: #{tpu_custom_call.1} parent=1 // loop_exit
      _
    %1392 = vsyncpa [#allocation3], 1
    %s1393 = scalar_lea.sflag [#allocation3], 1
    %1394 = vsyncpa %s1393, 1

</llo_original>
